<compile_context>
chip_gen: v6e
topology: v6e:2x2x1
jax: 0.10.0
libtpu: 0.0.40
codegen_flags: <defaults>
</compile_context>

<pallas_src>
import numpy as np
import jax
import jax.numpy as jnp
from jax.experimental import pallas as pl
from jax.experimental.pallas import tpu as pltpu

LANE = 128


def _round_up(x, m):
    return (x + m - 1) // m * m


# --------------------------------------------------------------------------
# Pallas kernel: fused 4-layer MLP for one (TILE_B, 128) activation tile
# --------------------------------------------------------------------------
def actor_ddpg_kernel(x_ref,
                      w1_ref, b1_ref,
                      w2_ref, b2_ref,
                      w3_ref, b3_ref,
                      w4_ref, b4_ref,
                      out_ref):
    # Activations stay f32 for the elementwise path; cast to bf16 only at the
    # MXU boundary, accumulate in f32.
    h = x_ref[...]
    h = jnp.maximum(
        jnp.dot(h.astype(jnp.bfloat16), w1_ref[...],
                preferred_element_type=jnp.float32) + b1_ref[...], 0.0)
    h = jnp.maximum(
        jnp.dot(h.astype(jnp.bfloat16), w2_ref[...],
                preferred_element_type=jnp.float32) + b2_ref[...], 0.0)
    h = jnp.maximum(
        jnp.dot(h.astype(jnp.bfloat16), w3_ref[...],
                preferred_element_type=jnp.float32) + b3_ref[...], 0.0)
    out_ref[...] = jnp.tanh(
        jnp.dot(h.astype(jnp.bfloat16), w4_ref[...],
                preferred_element_type=jnp.float32) + b4_ref[...])


# --------------------------------------------------------------------------
# Wrapper: pad to lane/sublane-friendly shapes, grid over the batch
# --------------------------------------------------------------------------
def actor_ddpg_forward(state, kparams, action_size, *, tile_b=256):
    """state: (B, S) f32.

    kparams: list of (W_pad bf16 (in_pad, out_pad), b_pad f32 (1, out_pad)),
    lane-padded (multiples of 128), produced by prepare_kernel_params().
    Returns (B, action_size) f32 actions.
    """
    B, S = state.shape
    in_pad = kparams[0][0].shape[0]     # lane-padded state width
    out_pad = kparams[-1][0].shape[1]   # lane-padded action width

    # MXU-aligned batch tile (multiple of 8 sublanes), never larger than needed.
    tile_b = min(tile_b, _round_up(B, 8))
    b_pad = _round_up(B, tile_b)

    # Zero-pad batch (ragged last tile) and the state feature dim (24 -> 128).
    x = jnp.zeros((b_pad, in_pad), jnp.float32).at[:B, :S].set(state)

    flat_inputs = [x]
    in_specs = [pl.BlockSpec((tile_b, in_pad), lambda i: (i, 0))]
    for w, b in kparams:
        flat_inputs += [w, b]
        # Constant index_map: weights/biases are resident in VMEM across steps.
        in_specs.append(pl.BlockSpec(w.shape, lambda i: (0, 0)))
        in_specs.append(pl.BlockSpec(b.shape, lambda i: (0, 0)))

    out = pl.pallas_call(
        actor_ddpg_kernel,
        out_shape=jax.ShapeDtypeStruct((b_pad, out_pad), jnp.float32),
        grid=(b_pad // tile_b,),
        in_specs=in_specs,
        out_specs=pl.BlockSpec((tile_b, out_pad), lambda i: (i, 0)),
        compiler_params=pltpu.CompilerParams(
            dimension_semantics=("parallel",),       # megacore split on v7x
            vmem_limit_bytes=32 * 1024 * 1024),      # footprint is bounded per step
    )(*flat_inputs)

    return out[:B, :action_size]


# --------------------------------------------------------------------------
# Parameter init mirroring Actor_DDPG.reset_parameters()
# --------------------------------------------------------------------------
def init_actor_params(key, state_size, action_size, fc_units=(256, 256, 128)):
    """Logical f32 params: list of (W (in, out), b (out,))."""
    starter = [state_size] + list(fc_units)
    stopper = list(fc_units) + [action_size]
    params = []
    n_layers = len(starter)
    keys = jax.random.split(key, 2 * n_layers)

    for i in range(n_layers):
        in_f, out_f = starter[i], stopper[i]
        kw, kb = keys[2 * i], keys[2 * i + 1]
        if i < n_layers - 1:
            # hidden_init: fan = weight.size(0) = out_features (as in reference)
            lim = 1.0 / np.sqrt(out_f)
            w = jax.random.uniform(kw, (out_f, in_f), jnp.float32, -lim, lim)
            # PyTorch Linear default bias init (uniform over 1/sqrt(fan_in))
            blim = 1.0 / np.sqrt(in_f)
            b = jax.random.uniform(kb, (out_f,), jnp.float32, -blim, blim)
        else:
            # orthogonal init * 0.001, bias = 0
            a = jax.random.normal(kw, (max(out_f, in_f), min(out_f, in_f)), jnp.float32)
            q, r = jnp.linalg.qr(a)
            q = q * jnp.sign(jnp.diag(r))
            w = (q if out_f >= in_f else q.T) * 0.001
            w = w.reshape(out_f, in_f)
            b = jnp.zeros((out_f,), jnp.float32)
        params.append((jnp.asarray(w).T.astype(jnp.float32),   # stored (in, out)
                       jnp.asarray(b).astype(jnp.float32)))
    return params


def prepare_kernel_params(params):
    """Pad every layer's dims up to multiples of 128 (lane-dense) and cast
    weights to bf16.  Padding is zeros, so the padded lanes stay exactly zero
    through relu/tanh and are sliced off in the wrapper."""
    kparams = []
    for w, b in params:
        in_f, out_f = w.shape
        in_pad = _round_up(in_f, LANE)
        out_pad = _round_up(out_f, LANE)
        wp = jnp.zeros((in_pad, out_pad), jnp.float32).at[:in_f, :out_f].set(w)
        bp = jnp.zeros((1, out_pad), jnp.float32).at[0, :out_f].set(b)
        kparams.append((wp.astype(jnp.bfloat16), bp))
    return kparams


# --------------------------------------------------------------------------
# Pure-JAX references
# --------------------------------------------------------------------------
def actor_ddpg_ref_f32(state, params):
    h = state
    for w, b in params[:-1]:
        h = jax.nn.relu(h @ w + b)
    w, b = params[-1]
    return jnp.tanh(h @ w + b)


def actor_ddpg_ref_bf16(state, kparams, action_size):
    """Mirrors the kernel's numerics (bf16 matmul inputs, f32 accumulation)."""
    B, S = state.shape
    in_pad = kparams[0][0].shape[0]
    h = jnp.zeros((B, in_pad), jnp.float32).at[:, :S].set(state)
    n = len(kparams)
    for idx, (w, b) in enumerate(kparams):
        z = jnp.dot(h.astype(jnp.bfloat16), w,
                    preferred_element_type=jnp.float32) + b
        h = jnp.maximum(z, 0.0) if idx < n - 1 else jnp.tanh(z)
    return h[:, :action_size]


if __name__ == "__main__":
    key = jax.random.PRNGKey(0)
    k_param, k_state = jax.random.split(key)

    batch = 8
    state_size = 24
    action_size = 2

    params = init_actor_params(k_param, state_size, action_size)
    kparams = prepare_kernel_params(params)
    state = jax.random.normal(k_state, (batch, state_size), jnp.float32)

    out = actor_ddpg_forward(state, kparams, action_size)
    out = jax.block_until_ready(out)
    assert out.shape == (batch, action_size)

    # Tight check against a reference with identical (bf16-weight) numerics.
    ref_bf16 = actor_ddpg_ref_bf16(state, kparams, action_size)
    np.testing.assert_allclose(np.asarray(out), np.asarray(ref_bf16),
                               rtol=1e-2, atol=1e-5)

    # Loose sanity check against the full-f32 module semantics.
    ref_f32 = actor_ddpg_ref_f32(state, params)
    np.testing.assert_allclose(np.asarray(out), np.asarray(ref_f32),
                               rtol=1e-1, atol=1e-4)

    print("KERNEL_OK")
</pallas_src>

<mosaic_0001>
module attributes {stable_mosaic.version = 11 : i64} {
  func.func @actor_ddpg_kernel(%arg0: i32, %arg1: memref<8x128xf32, #tpu.memory_space<vmem>>, %arg2: memref<128x256xbf16, #tpu.memory_space<vmem>>, %arg3: memref<1x256xf32, #tpu.memory_space<vmem>>, %arg4: memref<256x256xbf16, #tpu.memory_space<vmem>>, %arg5: memref<1x256xf32, #tpu.memory_space<vmem>>, %arg6: memref<256x128xbf16, #tpu.memory_space<vmem>>, %arg7: memref<1x128xf32, #tpu.memory_space<vmem>>, %arg8: memref<128x128xbf16, #tpu.memory_space<vmem>>, %arg9: memref<1x128xf32, #tpu.memory_space<vmem>>, %arg10: memref<8x128xf32, #tpu.memory_space<vmem>>) attributes {dimension_semantics = [#tpu.dimension_semantics<parallel>], iteration_bounds = array<i64: 1>, scalar_prefetch = 0 : i64, scratch_operands = 0 : i64, tpu.core_type = #tpu.core_type<tc>, window_params = [{transform_indices = @transform_0, window_bounds = array<i64: 8, 128>}, {pipeline_mode = #tpu.pipeline_mode<synchronous>, transform_indices = @transform_1, window_bounds = array<i64: 128, 256>}, {pipeline_mode = #tpu.pipeline_mode<synchronous>, transform_indices = @transform_2, window_bounds = array<i64: 1, 256>}, {pipeline_mode = #tpu.pipeline_mode<synchronous>, transform_indices = @transform_3, window_bounds = array<i64: 256, 256>}, {pipeline_mode = #tpu.pipeline_mode<synchronous>, transform_indices = @transform_4, window_bounds = array<i64: 1, 256>}, {pipeline_mode = #tpu.pipeline_mode<synchronous>, transform_indices = @transform_5, window_bounds = array<i64: 256, 128>}, {pipeline_mode = #tpu.pipeline_mode<synchronous>, transform_indices = @transform_6, window_bounds = array<i64: 1, 128>}, {pipeline_mode = #tpu.pipeline_mode<synchronous>, transform_indices = @transform_7, window_bounds = array<i64: 128, 128>}, {pipeline_mode = #tpu.pipeline_mode<synchronous>, transform_indices = @transform_8, window_bounds = array<i64: 1, 128>}, {transform_indices = @transform_9, window_bounds = array<i64: 8, 128>}]} {
    %c0 = arith.constant 0 : index
    %c0_0 = arith.constant 0 : index
    %0 = vector.load %arg1[%c0, %c0_0] : memref<8x128xf32, #tpu.memory_space<vmem>>, vector<8x128xf32>
    %1 = arith.truncf %0 : vector<8x128xf32> to vector<8x128xbf16>
    %c0_1 = arith.constant 0 : index
    %c0_2 = arith.constant 0 : index
    %2 = vector.load %arg2[%c0_1, %c0_2] : memref<128x256xbf16, #tpu.memory_space<vmem>>, vector<128x256xbf16>
    %cst = arith.constant dense<0.000000e+00> : vector<8x256xf32>
    %3 = tpu.matmul %1, %2, %cst {dimension_numbers = #tpu.dot_dimension_numbers<[1], [0], [0], [1], [0, 0, 1, 1], [], []>} : vector<8x128xbf16>, vector<128x256xbf16>, vector<8x256xf32> -> vector<8x256xf32>
    %c0_3 = arith.constant 0 : index
    %c0_4 = arith.constant 0 : index
    %4 = vector.load %arg3[%c0_3, %c0_4] : memref<1x256xf32, #tpu.memory_space<vmem>>, vector<1x256xf32>
    %5 = vector.broadcast %4 : vector<1x256xf32> to vector<8x256xf32>
    %6 = arith.addf %3, %5 : vector<8x256xf32>
    %cst_5 = arith.constant 0.000000e+00 : f32
    %7 = vector.broadcast %cst_5 : f32 to vector<8x256xf32>
    %8 = arith.maximumf %6, %7 : vector<8x256xf32>
    %9 = arith.truncf %8 : vector<8x256xf32> to vector<8x256xbf16>
    %c0_6 = arith.constant 0 : index
    %c0_7 = arith.constant 0 : index
    %10 = vector.load %arg4[%c0_6, %c0_7] : memref<256x256xbf16, #tpu.memory_space<vmem>>, vector<256x256xbf16>
    %cst_8 = arith.constant dense<0.000000e+00> : vector<8x256xf32>
    %11 = tpu.matmul %9, %10, %cst_8 {dimension_numbers = #tpu.dot_dimension_numbers<[1], [0], [0], [1], [0, 0, 1, 1], [], []>} : vector<8x256xbf16>, vector<256x256xbf16>, vector<8x256xf32> -> vector<8x256xf32>
    %c0_9 = arith.constant 0 : index
    %c0_10 = arith.constant 0 : index
    %12 = vector.load %arg5[%c0_9, %c0_10] : memref<1x256xf32, #tpu.memory_space<vmem>>, vector<1x256xf32>
    %13 = vector.broadcast %12 : vector<1x256xf32> to vector<8x256xf32>
    %14 = arith.addf %11, %13 : vector<8x256xf32>
    %cst_11 = arith.constant 0.000000e+00 : f32
    %15 = vector.broadcast %cst_11 : f32 to vector<8x256xf32>
    %16 = arith.maximumf %14, %15 : vector<8x256xf32>
    %17 = arith.truncf %16 : vector<8x256xf32> to vector<8x256xbf16>
    %c0_12 = arith.constant 0 : index
    %c0_13 = arith.constant 0 : index
    %18 = vector.load %arg6[%c0_12, %c0_13] : memref<256x128xbf16, #tpu.memory_space<vmem>>, vector<256x128xbf16>
    %cst_14 = arith.constant dense<0.000000e+00> : vector<8x128xf32>
    %19 = tpu.matmul %17, %18, %cst_14 {dimension_numbers = #tpu.dot_dimension_numbers<[1], [0], [0], [1], [0, 0, 1, 1], [], []>} : vector<8x256xbf16>, vector<256x128xbf16>, vector<8x128xf32> -> vector<8x128xf32>
    %c0_15 = arith.constant 0 : index
    %c0_16 = arith.constant 0 : index
    %20 = vector.load %arg7[%c0_15, %c0_16] : memref<1x128xf32, #tpu.memory_space<vmem>>, vector<1x128xf32>
    %21 = vector.broadcast %20 : vector<1x128xf32> to vector<8x128xf32>
    %22 = arith.addf %19, %21 : vector<8x128xf32>
    %cst_17 = arith.constant 0.000000e+00 : f32
    %23 = vector.broadcast %cst_17 : f32 to vector<8x128xf32>
    %24 = arith.maximumf %22, %23 : vector<8x128xf32>
    %25 = arith.truncf %24 : vector<8x128xf32> to vector<8x128xbf16>
    %c0_18 = arith.constant 0 : index
    %c0_19 = arith.constant 0 : index
    %26 = vector.load %arg8[%c0_18, %c0_19] : memref<128x128xbf16, #tpu.memory_space<vmem>>, vector<128x128xbf16>
    %cst_20 = arith.constant dense<0.000000e+00> : vector<8x128xf32>
    %27 = tpu.matmul %25, %26, %cst_20 {dimension_numbers = #tpu.dot_dimension_numbers<[1], [0], [0], [1], [0, 0, 1, 1], [], []>} : vector<8x128xbf16>, vector<128x128xbf16>, vector<8x128xf32> -> vector<8x128xf32>
    %c0_21 = arith.constant 0 : index
    %c0_22 = arith.constant 0 : index
    %28 = vector.load %arg9[%c0_21, %c0_22] : memref<1x128xf32, #tpu.memory_space<vmem>>, vector<1x128xf32>
    %29 = vector.broadcast %28 : vector<1x128xf32> to vector<8x128xf32>
    %30 = arith.addf %27, %29 : vector<8x128xf32>
    %31 = math.tanh %30 : vector<8x128xf32>
    %c0_23 = arith.constant 0 : index
    %c0_24 = arith.constant 0 : index
    %32 = vector.load %arg10[%c0_23, %c0_24] : memref<8x128xf32, #tpu.memory_space<vmem>>, vector<8x128xf32>
    tpu.vector_store %arg10[%c0_23, %c0_24], %31 {strides = array<i32>} : memref<8x128xf32, #tpu.memory_space<vmem>>, vector<8x128xf32>,
    return
  }
  func.func @transform_0(%arg0: i32) -> (i32, i32) {
    %c0_i32 = arith.constant 0 : i32
    %c0_i32_0 = arith.constant 0 : i32
    return %arg0, %c0_i32 : i32, i32
  }
  func.func @transform_1(%arg0: i32) -> (i32, i32) {
    %c0_i32 = arith.constant 0 : i32
    %c0_i32_0 = arith.constant 0 : i32
    %c0_i32_1 = arith.constant 0 : i32
    return %c0_i32, %c0_i32_0 : i32, i32
  }
  func.func @transform_2(%arg0: i32) -> (i32, i32) {
    %c0_i32 = arith.constant 0 : i32
    %c0_i32_0 = arith.constant 0 : i32
    %c0_i32_1 = arith.constant 0 : i32
    return %c0_i32, %c0_i32_0 : i32, i32
  }
  func.func @transform_3(%arg0: i32) -> (i32, i32) {
    %c0_i32 = arith.constant 0 : i32
    %c0_i32_0 = arith.constant 0 : i32
    %c0_i32_1 = arith.constant 0 : i32
    return %c0_i32, %c0_i32_0 : i32, i32
  }
  func.func @transform_4(%arg0: i32) -> (i32, i32) {
    %c0_i32 = arith.constant 0 : i32
    %c0_i32_0 = arith.constant 0 : i32
    %c0_i32_1 = arith.constant 0 : i32
    return %c0_i32, %c0_i32_0 : i32, i32
  }
  func.func @transform_5(%arg0: i32) -> (i32, i32) {
    %c0_i32 = arith.constant 0 : i32
    %c0_i32_0 = arith.constant 0 : i32
    %c0_i32_1 = arith.constant 0 : i32
    return %c0_i32, %c0_i32_0 : i32, i32
  }
  func.func @transform_6(%arg0: i32) -> (i32, i32) {
    %c0_i32 = arith.constant 0 : i32
    %c0_i32_0 = arith.constant 0 : i32
    %c0_i32_1 = arith.constant 0 : i32
    return %c0_i32, %c0_i32_0 : i32, i32
  }
  func.func @transform_7(%arg0: i32) -> (i32, i32) {
    %c0_i32 = arith.constant 0 : i32
    %c0_i32_0 = arith.constant 0 : i32
    %c0_i32_1 = arith.constant 0 : i32
    return %c0_i32, %c0_i32_0 : i32, i32
  }
  func.func @transform_8(%arg0: i32) -> (i32, i32) {
    %c0_i32 = arith.constant 0 : i32
    %c0_i32_0 = arith.constant 0 : i32
    %c0_i32_1 = arith.constant 0 : i32
    return %c0_i32, %c0_i32_0 : i32, i32
  }
  func.func @transform_9(%arg0: i32) -> (i32, i32) {
    %c0_i32 = arith.constant 0 : i32
    %c0_i32_0 = arith.constant 0 : i32
    return %arg0, %c0_i32 : i32, i32
  }
}

</mosaic_0001>

<llo_original>
// kernel: tpu_custom_call.1
$region0: #{tpu_custom_call.1}
  #allocation0 [shape = 'u32[]', space=smem, size = 0x4, offset = 0x4, fixed_abs, tag = 'smem constant byte address 0x4 - core index']
  #allocation1 [shape = 'u32[144,128]{1,0:T(1,128)}', space=vmem, size = 0x12000, scoped, tag = 'internal scratch']
  %s0 = inlined_call_operand.hbm [shape: f32[8,128], index: 0, kind: input, shape index: {}]
  %s1 = inlined_call_operand.hbm [shape: bf16[128,256], index: 1, kind: input, shape index: {}]
  %s2 = inlined_call_operand.vmem [shape: f32[1,256], index: 2, kind: input, shape index: {}]
  %s3 = inlined_call_operand.hbm [shape: bf16[256,256], index: 3, kind: input, shape index: {}]
  %s4 = inlined_call_operand.vmem [shape: f32[1,256], index: 4, kind: input, shape index: {}]
  %s5 = inlined_call_operand.hbm [shape: bf16[256,128], index: 5, kind: input, shape index: {}]
  %s6 = inlined_call_operand.vmem [shape: f32[1,128], index: 6, kind: input, shape index: {}]
  %s7 = inlined_call_operand.hbm [shape: bf16[128,128], index: 7, kind: input, shape index: {}]
  %s8 = inlined_call_operand.vmem [shape: f32[1,128], index: 8, kind: input, shape index: {}]
  %s9 = inlined_call_operand.hbm [shape: f32[8,128], index: 9, kind: output, shape index: {}]
  %s10 = sld [smem:[#allocation0]]
  $region66: #{tpu_custom_call.1} parent=0
    _
  %s12 = ssub.s32 1, %s10
  %s13 = scalar_select 0, %s12, %s10
  $region1: #{tpu_custom_call.1} parent=0
    #allocation2 [shape = 'u8[4096]{0}', space=vmem, size = 0x1000, scoped, tag = 'input window, operand 0, single buffered']
    #allocation3 [shape = 's32[1]{0}', space=sflag, size = 0x4, scoped, tag = 'scoped memory for tpu_custom_call.1']
    #allocation4 [shape = 's32[1]{0}', space=sflag, size = 0x4, scoped, tag = 'scoped memory for tpu_custom_call.1']
    #allocation5 [shape = 'u8[65536]{0}', space=vmem, size = 0x10000, scoped, tag = 'input window, operand 1, single buffered']
    #allocation6 [shape = 's32[1]{0}', space=sflag, size = 0x4, scoped, tag = 'scoped memory for tpu_custom_call.1']
    #allocation7 [shape = 'u8[131072]{0}', space=vmem, size = 0x20000, scoped, tag = 'input window, operand 3, single buffered']
    #allocation8 [shape = 'u8[65536]{0}', space=vmem, size = 0x10000, scoped, tag = 'input window, operand 5, single buffered']
    #allocation9 [shape = 's32[1]{0}', space=sflag, size = 0x4, scoped, tag = 'scoped memory for tpu_custom_call.1']
    #allocation10 [shape = 'u8[32768]{0}', space=vmem, size = 0x8000, scoped, tag = 'input window, operand 7, single buffered']
    #allocation11 [shape = 'u8[4096]{0}', space=vmem, size = 0x1000, scoped, tag = 'output window, operand 0, single buffered']
    %14 = vsyncpa [#allocation3], 0
    %15 = vsyncpa [#allocation6], 0
    %16 = vsyncpa [#allocation9], 0
    %17 = vsyncpa [#allocation4], 0
    // Predicated region
    $region2: #{tpu_custom_call.1} parent=1 // pred_check
      _
    $region3: #{tpu_custom_call.1} parent=1 // pred_check_branch
      %19 = sbr.rel (0) target = $region5
    $region4: #{tpu_custom_call.1} parent=1 // pred_region
      %s21 = ssub.s32 128, 128
      %22 = vsyncadd [#allocation3], %s21
      %s24 = sshll.u32 [#allocation2], 4
      %s25 = int_to_ptr.vmem [resolvable:$true] %s24
      %27 = dma.hbm_to_vmem [thread:$0]  %s0, 128, %s25, [#allocation3]
    $region5: #{tpu_custom_call.1} parent=1 // pred_fallthru
      _
    // Predicated region
    $region6: #{tpu_custom_call.1} parent=1 // pred_check
      _
    $region7: #{tpu_custom_call.1} parent=1 // pred_check_branch
      %29 = sbr.rel (0) target = $region9
    $region8: #{tpu_custom_call.1} parent=1 // pred_region
      %s31 = ssub.s32 2048, 2048
      %32 = vsyncadd [#allocation6], %s31
      %s33 = sshll.u32 [#allocation5], 4
      %s34 = int_to_ptr.vmem [resolvable:$true] %s33
      %39 = dma.hbm_to_vmem [thread:$0]  %s1, 2048, %s34, [#allocation6], 128, 128, 8
    $region9: #{tpu_custom_call.1} parent=1 // pred_fallthru
      _
    // Predicated region
    $region10: #{tpu_custom_call.1} parent=1 // pred_check
      _
    $region11: #{tpu_custom_call.1} parent=1 // pred_check_branch
      %41 = sbr.rel (0) target = $region13
    $region12: #{tpu_custom_call.1} parent=1 // pred_region
      _
    $region13: #{tpu_custom_call.1} parent=1 // pred_fallthru
      _
    // Predicated region
    $region14: #{tpu_custom_call.1} parent=1 // pred_check
      _
    $region15: #{tpu_custom_call.1} parent=1 // pred_check_branch
      %43 = sbr.rel (0) target = $region17
    $region16: #{tpu_custom_call.1} parent=1 // pred_region
      %s45 = ssub.s32 4096, 4096
      %46 = vsyncadd [#allocation6], %s45
      %s47 = sshll.u32 [#allocation7], 4
      %s48 = int_to_ptr.vmem [resolvable:$true] %s47
      %53 = dma.hbm_to_vmem [thread:$0]  %s3, 4096, %s48, [#allocation6], 128, 128, 8
    $region17: #{tpu_custom_call.1} parent=1 // pred_fallthru
      _
    // Predicated region
    $region18: #{tpu_custom_call.1} parent=1 // pred_check
      _
    $region19: #{tpu_custom_call.1} parent=1 // pred_check_branch
      %55 = sbr.rel (0) target = $region21
    $region20: #{tpu_custom_call.1} parent=1 // pred_region
      _
    $region21: #{tpu_custom_call.1} parent=1 // pred_fallthru
      _
    // Predicated region
    $region22: #{tpu_custom_call.1} parent=1 // pred_check
      _
    $region23: #{tpu_custom_call.1} parent=1 // pred_check_branch
      %57 = sbr.rel (0) target = $region25
    $region24: #{tpu_custom_call.1} parent=1 // pred_region
      %s59 = ssub.s32 2048, 2048
      %60 = vsyncadd [#allocation9], %s59
      %s61 = sshll.u32 [#allocation8], 4
      %s62 = int_to_ptr.vmem [resolvable:$true] %s61
      %67 = dma.hbm_to_vmem [thread:$0]  %s5, 2048, %s62, [#allocation9], 64, 64, 4
    $region25: #{tpu_custom_call.1} parent=1 // pred_fallthru
      _
    // Predicated region
    $region26: #{tpu_custom_call.1} parent=1 // pred_check
      _
    $region27: #{tpu_custom_call.1} parent=1 // pred_check_branch
      %69 = sbr.rel (0) target = $region29
    $region28: #{tpu_custom_call.1} parent=1 // pred_region
      _
    $region29: #{tpu_custom_call.1} parent=1 // pred_fallthru
      _
    // Predicated region
    $region30: #{tpu_custom_call.1} parent=1 // pred_check
      _
    $region31: #{tpu_custom_call.1} parent=1 // pred_check_branch
      %71 = sbr.rel (0) target = $region33
    $region32: #{tpu_custom_call.1} parent=1 // pred_region
      %s73 = ssub.s32 1024, 1024
      %74 = vsyncadd [#allocation9], %s73
      %s75 = sshll.u32 [#allocation10], 4
      %s76 = int_to_ptr.vmem [resolvable:$true] %s75
      %81 = dma.hbm_to_vmem [thread:$0]  %s7, 1024, %s76, [#allocation9], 64, 64, 4
    $region33: #{tpu_custom_call.1} parent=1 // pred_fallthru
      _
    // Predicated region
    $region34: #{tpu_custom_call.1} parent=1 // pred_check
      _
    $region35: #{tpu_custom_call.1} parent=1 // pred_check_branch
      %83 = sbr.rel (0) target = $region37
    $region36: #{tpu_custom_call.1} parent=1 // pred_region
      _
    $region37: #{tpu_custom_call.1} parent=1 // pred_fallthru
      _
    // Predicated region
    $region38: #{tpu_custom_call.1} parent=1 // pred_check
      _
    $region39: #{tpu_custom_call.1} parent=1 // pred_check_branch
      %85 = sbr.rel (0) target = $region41
    $region40: #{tpu_custom_call.1} parent=1 // pred_region
      %86 = dma.done [#allocation3], 128
    $region41: #{tpu_custom_call.1} parent=1 // pred_fallthru
      _
    // Predicated region
    $region42: #{tpu_custom_call.1} parent=1 // pred_check
      _
    $region43: #{tpu_custom_call.1} parent=1 // pred_check_branch
      %88 = sbr.rel (0) target = $region45
    $region44: #{tpu_custom_call.1} parent=1 // pred_region
      %89 = dma.done [#allocation6], 2048
    $region45: #{tpu_custom_call.1} parent=1 // pred_fallthru
      _
    // Predicated region
    $region46: #{tpu_custom_call.1} parent=1 // pred_check
      _
    $region47: #{tpu_custom_call.1} parent=1 // pred_check_branch
      %91 = sbr.rel (0) target = $region49
    $region48: #{tpu_custom_call.1} parent=1 // pred_region
      %92 = dma.done [#allocation6], 4096
    $region49: #{tpu_custom_call.1} parent=1 // pred_fallthru
      _
    // Predicated region
    $region50: #{tpu_custom_call.1} parent=1 // pred_check
      _
    $region51: #{tpu_custom_call.1} parent=1 // pred_check_branch
      %94 = sbr.rel (0) target = $region53
    $region52: #{tpu_custom_call.1} parent=1 // pred_region
      %95 = dma.done [#allocation9], 2048
    $region53: #{tpu_custom_call.1} parent=1 // pred_fallthru
      _
    // Predicated region
    $region54: #{tpu_custom_call.1} parent=1 // pred_check
      _
    $region55: #{tpu_custom_call.1} parent=1 // pred_check_branch
      %97 = sbr.rel (0) target = $region57
    $region56: #{tpu_custom_call.1} parent=1 // pred_region
      %98 = dma.done [#allocation9], 1024
    $region57: #{tpu_custom_call.1} parent=1 // pred_fallthru
      _
    %v100 = vld [vmem:[#allocation2] sm:$0xff]
    %v101 = vpack.c.bf16 %v100, %v100
    %v102 = vld [vmem:[#allocation5] sm:$0xff]
    %v103 = vld [vmem:[#allocation5 + $0x8] sm:$0xff]
    %v104 = vld [vmem:[#allocation5 + $0x10] sm:$0xff]
    %v105 = vld [vmem:[#allocation5 + $0x18] sm:$0xff]
    %v106 = vld [vmem:[#allocation5 + $0x20] sm:$0xff]
    %v107 = vld [vmem:[#allocation5 + $0x28] sm:$0xff]
    %v108 = vld [vmem:[#allocation5 + $0x30] sm:$0xff]
    %v109 = vld [vmem:[#allocation5 + $0x38] sm:$0xff]
    %v110 = vld [vmem:[#allocation5 + $0x40] sm:$0xff]
    %v111 = vld [vmem:[#allocation5 + $0x48] sm:$0xff]
    %v112 = vld [vmem:[#allocation5 + $0x50] sm:$0xff]
    %v113 = vld [vmem:[#allocation5 + $0x58] sm:$0xff]
    %v114 = vld [vmem:[#allocation5 + $0x60] sm:$0xff]
    %v115 = vld [vmem:[#allocation5 + $0x68] sm:$0xff]
    %v116 = vld [vmem:[#allocation5 + $0x70] sm:$0xff]
    %v117 = vld [vmem:[#allocation5 + $0x78] sm:$0xff]
    %v118 = vld [vmem:[%s2] sm:$0x3]
    %v120 = vlaneseq
    %v121 = vshrl.u32 %v120, 7
    %v122 = vsub.s32 0, %v121
    %v123 = vrot.slane %v118, %v122
    %v124 = vlaneseq
    %v125 = vshrl.u32 %v124, 7
    %v126 = vsub.s32 1, %v125
    %v127 = vrot.slane %v118, %v126
    %v146 = vunpack.c.l.b16 %v102
    %v147 = vunpack.c.h.b16 %v102
    %v148 = vunpack.c.l.b16 %v103
    %v149 = vunpack.c.h.b16 %v103
    %v150 = vunpack.c.l.b16 %v104
    %v151 = vunpack.c.h.b16 %v104
    %v152 = vunpack.c.l.b16 %v105
    %v153 = vunpack.c.h.b16 %v105
    %v154 = vunpack.c.l.b16 %v106
    %v155 = vunpack.c.h.b16 %v106
    %v156 = vunpack.c.l.b16 %v107
    %v157 = vunpack.c.h.b16 %v107
    %v158 = vunpack.c.l.b16 %v108
    %v159 = vunpack.c.h.b16 %v108
    %v160 = vunpack.c.l.b16 %v109
    %v161 = vunpack.c.h.b16 %v109
    %v162 = vunpack.c.l.b16 %v110
    %v163 = vunpack.c.h.b16 %v110
    %v164 = vunpack.c.l.b16 %v111
    %v165 = vunpack.c.h.b16 %v111
    %v166 = vunpack.c.l.b16 %v112
    %v167 = vunpack.c.h.b16 %v112
    %v168 = vunpack.c.l.b16 %v113
    %v169 = vunpack.c.h.b16 %v113
    %v170 = vunpack.c.l.b16 %v114
    %v171 = vunpack.c.h.b16 %v114
    %v172 = vunpack.c.l.b16 %v115
    %v173 = vunpack.c.h.b16 %v115
    %v174 = vunpack.c.l.b16 %v116
    %v175 = vunpack.c.h.b16 %v116
    %v176 = vunpack.c.l.b16 %v117
    %v177 = vunpack.c.h.b16 %v117
    %v178 = vpack.c.b16 %v148, %v146
    %v179 = vpack.c.b16 %v149, %v147
    %v180 = vpack.c.b16 %v152, %v150
    %v181 = vpack.c.b16 %v153, %v151
    %v182 = vpack.c.b16 %v156, %v154
    %v183 = vpack.c.b16 %v157, %v155
    %v184 = vpack.c.b16 %v160, %v158
    %v185 = vpack.c.b16 %v161, %v159
    %v186 = vpack.c.b16 %v164, %v162
    %v187 = vpack.c.b16 %v165, %v163
    %v188 = vpack.c.b16 %v168, %v166
    %v189 = vpack.c.b16 %v169, %v167
    %v190 = vpack.c.b16 %v172, %v170
    %v191 = vpack.c.b16 %v173, %v171
    %v192 = vpack.c.b16 %v176, %v174
    %v193 = vpack.c.b16 %v177, %v175
    %210 = vmatprep.subr.bf16.mxu0 %v193
    %211 = vmatpush1.bf16.msra.mxu0 %v192
    %212 = vmatprep.subr.bf16.mxu0 %v191
    %213 = vmatpush1.bf16.msra.mxu0 %v190
    %214 = vmatprep.subr.bf16.mxu0 %v189
    %215 = vmatpush1.bf16.msra.mxu0 %v188
    %216 = vmatprep.subr.bf16.mxu0 %v187
    %217 = vmatpush1.bf16.msra.mxu0 %v186
    %218 = vmatprep.subr.bf16.mxu0 %v185
    %219 = vmatpush1.bf16.msra.mxu0 %v184
    %220 = vmatprep.subr.bf16.mxu0 %v183
    %221 = vmatpush1.bf16.msra.mxu0 %v182
    %222 = vmatprep.subr.bf16.mxu0 %v181
    %223 = vmatpush1.bf16.msra.mxu0 %v180
    %224 = vmatprep.subr.bf16.mxu0 %v179
    %225 = vmatpush1.bf16.msra.mxu0 %v178
    %226 = vmatprep.subr.bf16.mxu0 0
    %227 = vmatpush2.bf16.msra.mxu0 0
    %228 = vmatprep.subr.bf16.mxu0 0
    %229 = vmatpush2.bf16.msra.mxu0 0
    %230 = vmatprep.subr.bf16.mxu0 0
    %231 = vmatpush2.bf16.msra.mxu0 0
    %232 = vmatprep.subr.bf16.mxu0 0
    %233 = vmatpush2.bf16.msra.mxu0 0
    %234 = vmatprep.subr.bf16.mxu0 0
    %235 = vmatpush2.bf16.msra.mxu0 0
    %236 = vmatprep.subr.bf16.mxu0 0
    %237 = vmatpush2.bf16.msra.mxu0 0
    %238 = vmatprep.subr.bf16.mxu0 0
    %239 = vmatpush2.bf16.msra.mxu0 0
    %240 = vmatprep.subr.bf16.mxu0 0
    %241 = vmatpush2.bf16.msra.mxu0 0
    %242 = vmatprep.mubr.bf16.mxu0 0
    %243 = vmatmul.mubr.bf16.gmra.mxu0 %v101
    %v244 = vpop.f32.mrf.mxu0
    %v245 = vadd.f32 %v123, %v244
    %v246 = vpop.f32.mrf.mxu0
    %v247 = vadd.f32 %v127, %v246
    %v248 = vpop.f32.mrf.mxu0
    %v249 = vpop.f32.mrf.mxu0
    %250 = vdwg.mxu0
    %v251 = vmax.f32 %v245, 0.0
    %v252 = vmax.f32 %v247, 0.0
    %v253 = vpack.c.bf16 %v251, %v251
    %v254 = vpack.c.bf16 %v252, %v252
    %v255 = vld [vmem:[#allocation7] sm:$0xff]
    %v256 = vld [vmem:[#allocation7 + $0x8] sm:$0xff]
    %v257 = vld [vmem:[#allocation7 + $0x10] sm:$0xff]
    %v258 = vld [vmem:[#allocation7 + $0x18] sm:$0xff]
    %v259 = vld [vmem:[#allocation7 + $0x20] sm:$0xff]
    %v260 = vld [vmem:[#allocation7 + $0x28] sm:$0xff]
    %v261 = vld [vmem:[#allocation7 + $0x30] sm:$0xff]
    %v262 = vld [vmem:[#allocation7 + $0x38] sm:$0xff]
    %v263 = vld [vmem:[#allocation7 + $0x40] sm:$0xff]
    %v264 = vld [vmem:[#allocation7 + $0x48] sm:$0xff]
    %v265 = vld [vmem:[#allocation7 + $0x50] sm:$0xff]
    %v266 = vld [vmem:[#allocation7 + $0x58] sm:$0xff]
    %v267 = vld [vmem:[#allocation7 + $0x60] sm:$0xff]
    %v268 = vld [vmem:[#allocation7 + $0x68] sm:$0xff]
    %v269 = vld [vmem:[#allocation7 + $0x70] sm:$0xff]
    %v270 = vld [vmem:[#allocation7 + $0x78] sm:$0xff]
    %v271 = vld [vmem:[#allocation7 + $0x80] sm:$0xff]
    %v272 = vld [vmem:[#allocation7 + $0x88] sm:$0xff]
    %v273 = vld [vmem:[#allocation7 + $0x90] sm:$0xff]
    %v274 = vld [vmem:[#allocation7 + $0x98] sm:$0xff]
    %v275 = vld [vmem:[#allocation7 + $0xa0] sm:$0xff]
    %v276 = vld [vmem:[#allocation7 + $0xa8] sm:$0xff]
    %v277 = vld [vmem:[#allocation7 + $0xb0] sm:$0xff]
    %v278 = vld [vmem:[#allocation7 + $0xb8] sm:$0xff]
    %v279 = vld [vmem:[#allocation7 + $0xc0] sm:$0xff]
    %v280 = vld [vmem:[#allocation7 + $0xc8] sm:$0xff]
    %v281 = vld [vmem:[#allocation7 + $0xd0] sm:$0xff]
    %v282 = vld [vmem:[#allocation7 + $0xd8] sm:$0xff]
    %v283 = vld [vmem:[#allocation7 + $0xe0] sm:$0xff]
    %v284 = vld [vmem:[#allocation7 + $0xe8] sm:$0xff]
    %v285 = vld [vmem:[#allocation7 + $0xf0] sm:$0xff]
    %v286 = vld [vmem:[#allocation7 + $0xf8] sm:$0xff]
    %v287 = vld [vmem:[%s4] sm:$0x3]
    %v289 = vlaneseq
    %v290 = vshrl.u32 %v289, 7
    %v291 = vsub.s32 0, %v290
    %v292 = vrot.slane %v287, %v291
    %v293 = vlaneseq
    %v294 = vshrl.u32 %v293, 7
    %v295 = vsub.s32 1, %v294
    %v296 = vrot.slane %v287, %v295
    %v331 = vunpack.c.l.b16 %v255
    %v332 = vunpack.c.h.b16 %v255
    %v333 = vunpack.c.l.b16 %v256
    %v334 = vunpack.c.h.b16 %v256
    %v335 = vunpack.c.l.b16 %v257
    %v336 = vunpack.c.h.b16 %v257
    %v337 = vunpack.c.l.b16 %v258
    %v338 = vunpack.c.h.b16 %v258
    %v339 = vunpack.c.l.b16 %v259
    %v340 = vunpack.c.h.b16 %v259
    %v341 = vunpack.c.l.b16 %v260
    %v342 = vunpack.c.h.b16 %v260
    %v343 = vunpack.c.l.b16 %v261
    %v344 = vunpack.c.h.b16 %v261
    %v345 = vunpack.c.l.b16 %v262
    %v346 = vunpack.c.h.b16 %v262
    %v347 = vunpack.c.l.b16 %v263
    %v348 = vunpack.c.h.b16 %v263
    %v349 = vunpack.c.l.b16 %v264
    %v350 = vunpack.c.h.b16 %v264
    %v351 = vunpack.c.l.b16 %v265
    %v352 = vunpack.c.h.b16 %v265
    %v353 = vunpack.c.l.b16 %v266
    %v354 = vunpack.c.h.b16 %v266
    %v355 = vunpack.c.l.b16 %v267
    %v356 = vunpack.c.h.b16 %v267
    %v357 = vunpack.c.l.b16 %v268
    %v358 = vunpack.c.h.b16 %v268
    %v359 = vunpack.c.l.b16 %v269
    %v360 = vunpack.c.h.b16 %v269
    %v361 = vunpack.c.l.b16 %v270
    %v362 = vunpack.c.h.b16 %v270
    %v363 = vunpack.c.l.b16 %v271
    %v364 = vunpack.c.h.b16 %v271
    %v365 = vunpack.c.l.b16 %v272
    %v366 = vunpack.c.h.b16 %v272
    %v367 = vunpack.c.l.b16 %v273
    %v368 = vunpack.c.h.b16 %v273
    %v369 = vunpack.c.l.b16 %v274
    %v370 = vunpack.c.h.b16 %v274
    %v371 = vunpack.c.l.b16 %v275
    %v372 = vunpack.c.h.b16 %v275
    %v373 = vunpack.c.l.b16 %v276
    %v374 = vunpack.c.h.b16 %v276
    %v375 = vunpack.c.l.b16 %v277
    %v376 = vunpack.c.h.b16 %v277
    %v377 = vunpack.c.l.b16 %v278
    %v378 = vunpack.c.h.b16 %v278
    %v379 = vunpack.c.l.b16 %v279
    %v380 = vunpack.c.h.b16 %v279
    %v381 = vunpack.c.l.b16 %v280
    %v382 = vunpack.c.h.b16 %v280
    %v383 = vunpack.c.l.b16 %v281
    %v384 = vunpack.c.h.b16 %v281
    %v385 = vunpack.c.l.b16 %v282
    %v386 = vunpack.c.h.b16 %v282
    %v387 = vunpack.c.l.b16 %v283
    %v388 = vunpack.c.h.b16 %v283
    %v389 = vunpack.c.l.b16 %v284
    %v390 = vunpack.c.h.b16 %v284
    %v391 = vunpack.c.l.b16 %v285
    %v392 = vunpack.c.h.b16 %v285
    %v393 = vunpack.c.l.b16 %v286
    %v394 = vunpack.c.h.b16 %v286
    %v395 = vpack.c.b16 %v333, %v331
    %v396 = vpack.c.b16 %v334, %v332
    %v397 = vpack.c.b16 %v337, %v335
    %v398 = vpack.c.b16 %v338, %v336
    %v399 = vpack.c.b16 %v341, %v339
    %v400 = vpack.c.b16 %v342, %v340
    %v401 = vpack.c.b16 %v345, %v343
    %v402 = vpack.c.b16 %v346, %v344
    %v403 = vpack.c.b16 %v349, %v347
    %v404 = vpack.c.b16 %v350, %v348
    %v405 = vpack.c.b16 %v353, %v351
    %v406 = vpack.c.b16 %v354, %v352
    %v407 = vpack.c.b16 %v357, %v355
    %v408 = vpack.c.b16 %v358, %v356
    %v409 = vpack.c.b16 %v361, %v359
    %v410 = vpack.c.b16 %v362, %v360
    %v411 = vpack.c.b16 %v365, %v363
    %v412 = vpack.c.b16 %v366, %v364
    %v413 = vpack.c.b16 %v369, %v367
    %v414 = vpack.c.b16 %v370, %v368
    %v415 = vpack.c.b16 %v373, %v371
    %v416 = vpack.c.b16 %v374, %v372
    %v417 = vpack.c.b16 %v377, %v375
    %v418 = vpack.c.b16 %v378, %v376
    %v419 = vpack.c.b16 %v381, %v379
    %v420 = vpack.c.b16 %v382, %v380
    %v421 = vpack.c.b16 %v385, %v383
    %v422 = vpack.c.b16 %v386, %v384
    %v423 = vpack.c.b16 %v389, %v387
    %v424 = vpack.c.b16 %v390, %v388
    %v425 = vpack.c.b16 %v393, %v391
    %v426 = vpack.c.b16 %v394, %v392
    %459 = vmatprep.subr.bf16.mxu0 %v410
    %460 = vmatpush1.bf16.msra.mxu0 %v409
    %461 = vmatprep.subr.bf16.mxu0 %v408
    %462 = vmatpush1.bf16.msra.mxu0 %v407
    %463 = vmatprep.subr.bf16.mxu0 %v406
    %464 = vmatpush1.bf16.msra.mxu0 %v405
    %465 = vmatprep.subr.bf16.mxu0 %v404
    %466 = vmatpush1.bf16.msra.mxu0 %v403
    %467 = vmatprep.subr.bf16.mxu0 %v402
    %468 = vmatpush1.bf16.msra.mxu0 %v401
    %469 = vmatprep.subr.bf16.mxu0 %v400
    %470 = vmatpush1.bf16.msra.mxu0 %v399
    %471 = vmatprep.subr.bf16.mxu0 %v398
    %472 = vmatpush1.bf16.msra.mxu0 %v397
    %473 = vmatprep.subr.bf16.mxu0 %v396
    %474 = vmatpush1.bf16.msra.mxu0 %v395
    %475 = vmatprep.subr.bf16.mxu0 %v426
    %476 = vmatpush2.bf16.msra.mxu0 %v425
    %477 = vmatprep.subr.bf16.mxu0 %v424
    %478 = vmatpush2.bf16.msra.mxu0 %v423
    %479 = vmatprep.subr.bf16.mxu0 %v422
    %480 = vmatpush2.bf16.msra.mxu0 %v421
    %481 = vmatprep.subr.bf16.mxu0 %v420
    %482 = vmatpush2.bf16.msra.mxu0 %v419
    %483 = vmatprep.subr.bf16.mxu0 %v418
    %484 = vmatpush2.bf16.msra.mxu0 %v417
    %485 = vmatprep.subr.bf16.mxu0 %v416
    %486 = vmatpush2.bf16.msra.mxu0 %v415
    %487 = vmatprep.subr.bf16.mxu0 %v414
    %488 = vmatpush2.bf16.msra.mxu0 %v413
    %489 = vmatprep.subr.bf16.mxu0 %v412
    %490 = vmatpush2.bf16.msra.mxu0 %v411
    %491 = vmatprep.mubr.bf16.mxu0 %v254
    %492 = vmatmul.mubr.bf16.gmra.mxu0 %v253
    %v493 = vpop.f32.mrf.mxu0
    %v494 = vadd.f32 %v292, %v493
    %v495 = vpop.f32.mrf.mxu0
    %v496 = vadd.f32 %v296, %v495
    %v497 = vpop.f32.mrf.mxu0
    %v498 = vpop.f32.mrf.mxu0
    %499 = vdwg.mxu0
    %v500 = vmax.f32 %v494, 0.0
    %v501 = vmax.f32 %v496, 0.0
    %v502 = vpack.c.bf16 %v500, %v500
    %v503 = vpack.c.bf16 %v501, %v501
    %v504 = vld [vmem:[#allocation8] sm:$0xf]
    %v505 = vld [vmem:[#allocation8 + $0x4] sm:$0xf]
    %v506 = vld [vmem:[#allocation8 + $0x8] sm:$0xf]
    %v507 = vld [vmem:[#allocation8 + $0xc] sm:$0xf]
    %v508 = vld [vmem:[#allocation8 + $0x10] sm:$0xf]
    %v509 = vld [vmem:[#allocation8 + $0x14] sm:$0xf]
    %v510 = vld [vmem:[#allocation8 + $0x18] sm:$0xf]
    %v511 = vld [vmem:[#allocation8 + $0x1c] sm:$0xf]
    %v512 = vld [vmem:[#allocation8 + $0x20] sm:$0xf]
    %v513 = vld [vmem:[#allocation8 + $0x24] sm:$0xf]
    %v514 = vld [vmem:[#allocation8 + $0x28] sm:$0xf]
    %v515 = vld [vmem:[#allocation8 + $0x2c] sm:$0xf]
    %v516 = vld [vmem:[#allocation8 + $0x30] sm:$0xf]
    %v517 = vld [vmem:[#allocation8 + $0x34] sm:$0xf]
    %v518 = vld [vmem:[#allocation8 + $0x38] sm:$0xf]
    %v519 = vld [vmem:[#allocation8 + $0x3c] sm:$0xf]
    %v520 = vld [vmem:[#allocation8 + $0x40] sm:$0xf]
    %v521 = vld [vmem:[#allocation8 + $0x44] sm:$0xf]
    %v522 = vld [vmem:[#allocation8 + $0x48] sm:$0xf]
    %v523 = vld [vmem:[#allocation8 + $0x4c] sm:$0xf]
    %v524 = vld [vmem:[#allocation8 + $0x50] sm:$0xf]
    %v525 = vld [vmem:[#allocation8 + $0x54] sm:$0xf]
    %v526 = vld [vmem:[#allocation8 + $0x58] sm:$0xf]
    %v527 = vld [vmem:[#allocation8 + $0x5c] sm:$0xf]
    %v528 = vld [vmem:[#allocation8 + $0x60] sm:$0xf]
    %v529 = vld [vmem:[#allocation8 + $0x64] sm:$0xf]
    %v530 = vld [vmem:[#allocation8 + $0x68] sm:$0xf]
    %v531 = vld [vmem:[#allocation8 + $0x6c] sm:$0xf]
    %v532 = vld [vmem:[#allocation8 + $0x70] sm:$0xf]
    %v533 = vld [vmem:[#allocation8 + $0x74] sm:$0xf]
    %v534 = vld [vmem:[#allocation8 + $0x78] sm:$0xf]
    %v535 = vld [vmem:[#allocation8 + $0x7c] sm:$0xf]
    %v536 = vld [vmem:[%s6] sm:$0x1]
    %v538 = vlaneseq
    %v539 = vshrl.u32 %v538, 7
    %v540 = vsub.s32 0, %v539
    %v541 = vrot.slane %v536, %v540
    %v575 = vunpack.c.l.b16 %v504
    %v576 = vunpack.c.l.b16 %v505
    %v577 = vunpack.c.l.b16 %v506
    %v578 = vunpack.c.l.b16 %v507
    %v579 = vunpack.c.l.b16 %v508
    %v580 = vunpack.c.l.b16 %v509
    %v581 = vunpack.c.l.b16 %v510
    %v582 = vunpack.c.l.b16 %v511
    %v583 = vunpack.c.l.b16 %v512
    %v584 = vunpack.c.l.b16 %v513
    %v585 = vunpack.c.l.b16 %v514
    %v586 = vunpack.c.l.b16 %v515
    %v587 = vunpack.c.l.b16 %v516
    %v588 = vunpack.c.l.b16 %v517
    %v589 = vunpack.c.l.b16 %v518
    %v590 = vunpack.c.l.b16 %v519
    %v591 = vunpack.c.l.b16 %v520
    %v592 = vunpack.c.l.b16 %v521
    %v593 = vunpack.c.l.b16 %v522
    %v594 = vunpack.c.l.b16 %v523
    %v595 = vunpack.c.l.b16 %v524
    %v596 = vunpack.c.l.b16 %v525
    %v597 = vunpack.c.l.b16 %v526
    %v598 = vunpack.c.l.b16 %v527
    %v599 = vunpack.c.l.b16 %v528
    %v600 = vunpack.c.l.b16 %v529
    %v601 = vunpack.c.l.b16 %v530
    %v602 = vunpack.c.l.b16 %v531
    %v603 = vunpack.c.l.b16 %v532
    %v604 = vunpack.c.l.b16 %v533
    %v605 = vunpack.c.l.b16 %v534
    %v606 = vunpack.c.l.b16 %v535
    %v607 = vpack.c.b16 %v576, %v575
    %v608 = vpack.c.b16 %v578, %v577
    %v609 = vpack.c.b16 %v580, %v579
    %v610 = vpack.c.b16 %v582, %v581
    %v611 = vpack.c.b16 %v584, %v583
    %v612 = vpack.c.b16 %v586, %v585
    %v613 = vpack.c.b16 %v588, %v587
    %v614 = vpack.c.b16 %v590, %v589
    %v615 = vpack.c.b16 %v592, %v591
    %v616 = vpack.c.b16 %v594, %v593
    %v617 = vpack.c.b16 %v596, %v595
    %v618 = vpack.c.b16 %v598, %v597
    %v619 = vpack.c.b16 %v600, %v599
    %v620 = vpack.c.b16 %v602, %v601
    %v621 = vpack.c.b16 %v604, %v603
    %v622 = vpack.c.b16 %v606, %v605
    %639 = vmatprep.subr.bf16.mxu0 0
    %640 = vmatpush1.bf16.msra.mxu0 %v614
    %641 = vmatprep.subr.bf16.mxu0 0
    %642 = vmatpush1.bf16.msra.mxu0 %v613
    %643 = vmatprep.subr.bf16.mxu0 0
    %644 = vmatpush1.bf16.msra.mxu0 %v612
    %645 = vmatprep.subr.bf16.mxu0 0
    %646 = vmatpush1.bf16.msra.mxu0 %v611
    %647 = vmatprep.subr.bf16.mxu0 0
    %648 = vmatpush1.bf16.msra.mxu0 %v610
    %649 = vmatprep.subr.bf16.mxu0 0
    %650 = vmatpush1.bf16.msra.mxu0 %v609
    %651 = vmatprep.subr.bf16.mxu0 0
    %652 = vmatpush1.bf16.msra.mxu0 %v608
    %653 = vmatprep.subr.bf16.mxu0 0
    %654 = vmatpush1.bf16.msra.mxu0 %v607
    %655 = vmatprep.subr.bf16.mxu0 0
    %656 = vmatpush2.bf16.msra.mxu0 %v622
    %657 = vmatprep.subr.bf16.mxu0 0
    %658 = vmatpush2.bf16.msra.mxu0 %v621
    %659 = vmatprep.subr.bf16.mxu0 0
    %660 = vmatpush2.bf16.msra.mxu0 %v620
    %661 = vmatprep.subr.bf16.mxu0 0
    %662 = vmatpush2.bf16.msra.mxu0 %v619
    %663 = vmatprep.subr.bf16.mxu0 0
    %664 = vmatpush2.bf16.msra.mxu0 %v618
    %665 = vmatprep.subr.bf16.mxu0 0
    %666 = vmatpush2.bf16.msra.mxu0 %v617
    %667 = vmatprep.subr.bf16.mxu0 0
    %668 = vmatpush2.bf16.msra.mxu0 %v616
    %669 = vmatprep.subr.bf16.mxu0 0
    %670 = vmatpush2.bf16.msra.mxu0 %v615
    %671 = vmatprep.mubr.bf16.mxu0 %v503
    %672 = vmatmul.mubr.bf16.gmra.mxu0 %v502
    %v673 = vpop.f32.mrf.mxu0
    %v674 = vadd.f32 %v541, %v673
    %v675 = vpop.f32.mrf.mxu0
    %v676 = vpop.f32.mrf.mxu0
    %v677 = vpop.f32.mrf.mxu0
    %678 = vdwg.mxu0
    %v679 = vmax.f32 %v674, 0.0
    %v680 = vpack.c.bf16 %v679, %v679
    %v681 = vld [vmem:[#allocation10] sm:$0xf]
    %v682 = vld [vmem:[#allocation10 + $0x4] sm:$0xf]
    %v683 = vld [vmem:[#allocation10 + $0x8] sm:$0xf]
    %v684 = vld [vmem:[#allocation10 + $0xc] sm:$0xf]
    %v685 = vld [vmem:[#allocation10 + $0x10] sm:$0xf]
    %v686 = vld [vmem:[#allocation10 + $0x14] sm:$0xf]
    %v687 = vld [vmem:[#allocation10 + $0x18] sm:$0xf]
    %v688 = vld [vmem:[#allocation10 + $0x1c] sm:$0xf]
    %v689 = vld [vmem:[#allocation10 + $0x20] sm:$0xf]
    %v690 = vld [vmem:[#allocation10 + $0x24] sm:$0xf]
    %v691 = vld [vmem:[#allocation10 + $0x28] sm:$0xf]
    %v692 = vld [vmem:[#allocation10 + $0x2c] sm:$0xf]
    %v693 = vld [vmem:[#allocation10 + $0x30] sm:$0xf]
    %v694 = vld [vmem:[#allocation10 + $0x34] sm:$0xf]
    %v695 = vld [vmem:[#allocation10 + $0x38] sm:$0xf]
    %v696 = vld [vmem:[#allocation10 + $0x3c] sm:$0xf]
    %v697 = vld [vmem:[%s8] sm:$0x1]
    %v699 = vlaneseq
    %v700 = vshrl.u32 %v699, 7
    %v701 = vsub.s32 0, %v700
    %v702 = vrot.slane %v697, %v701
    %v720 = vunpack.c.l.b16 %v681
    %v721 = vunpack.c.l.b16 %v682
    %v722 = vunpack.c.l.b16 %v683
    %v723 = vunpack.c.l.b16 %v684
    %v724 = vunpack.c.l.b16 %v685
    %v725 = vunpack.c.l.b16 %v686
    %v726 = vunpack.c.l.b16 %v687
    %v727 = vunpack.c.l.b16 %v688
    %v728 = vunpack.c.l.b16 %v689
    %v729 = vunpack.c.l.b16 %v690
    %v730 = vunpack.c.l.b16 %v691
    %v731 = vunpack.c.l.b16 %v692
    %v732 = vunpack.c.l.b16 %v693
    %v733 = vunpack.c.l.b16 %v694
    %v734 = vunpack.c.l.b16 %v695
    %v735 = vunpack.c.l.b16 %v696
    %v736 = vpack.c.b16 %v721, %v720
    %v737 = vpack.c.b16 %v723, %v722
    %v738 = vpack.c.b16 %v725, %v724
    %v739 = vpack.c.b16 %v727, %v726
    %v740 = vpack.c.b16 %v729, %v728
    %v741 = vpack.c.b16 %v731, %v730
    %v742 = vpack.c.b16 %v733, %v732
    %v743 = vpack.c.b16 %v735, %v734
    %752 = vmatprep.subr.bf16.mxu0 0
    %753 = vmatpush1.bf16.msra.mxu0 %v743
    %754 = vmatprep.subr.bf16.mxu0 0
    %755 = vmatpush1.bf16.msra.mxu0 %v742
    %756 = vmatprep.subr.bf16.mxu0 0
    %757 = vmatpush1.bf16.msra.mxu0 %v741
    %758 = vmatprep.subr.bf16.mxu0 0
    %759 = vmatpush1.bf16.msra.mxu0 %v740
    %760 = vmatprep.subr.bf16.mxu0 0
    %761 = vmatpush1.bf16.msra.mxu0 %v739
    %762 = vmatprep.subr.bf16.mxu0 0
    %763 = vmatpush1.bf16.msra.mxu0 %v738
    %764 = vmatprep.subr.bf16.mxu0 0
    %765 = vmatpush1.bf16.msra.mxu0 %v737
    %766 = vmatprep.subr.bf16.mxu0 0
    %767 = vmatpush1.bf16.msra.mxu0 %v736
    %768 = vmatprep.subr.bf16.mxu0 0
    %769 = vmatpush2.bf16.msra.mxu0 0
    %770 = vmatprep.subr.bf16.mxu0 0
    %771 = vmatpush2.bf16.msra.mxu0 0
    %772 = vmatprep.subr.bf16.mxu0 0
    %773 = vmatpush2.bf16.msra.mxu0 0
    %774 = vmatprep.subr.bf16.mxu0 0
    %775 = vmatpush2.bf16.msra.mxu0 0
    %776 = vmatprep.subr.bf16.mxu0 0
    %777 = vmatpush2.bf16.msra.mxu0 0
    %778 = vmatprep.subr.bf16.mxu0 0
    %779 = vmatpush2.bf16.msra.mxu0 0
    %780 = vmatprep.subr.bf16.mxu0 0
    %781 = vmatpush2.bf16.msra.mxu0 0
    %782 = vmatprep.subr.bf16.mxu0 0
    %783 = vmatpush2.bf16.msra.mxu0 0
    %784 = vmatprep.mubr.bf16.mxu0 0
    %785 = vmatmul.mubr.bf16.gmra.mxu0 %v680
    %v786 = vpop.f32.mrf.mxu0
    %v787 = vadd.f32 %v702, %v786
    %v788 = vpop.f32.mrf.mxu0
    %v789 = vpop.f32.mrf.mxu0
    %v790 = vpop.f32.mrf.mxu0
    %791 = vdwg.mxu0
    %v792 = vtanh.pop %v787
    %793 = vst [vmem:[#allocation11] sm:$0xff] %v792
    // Predicated region
    $region58: #{tpu_custom_call.1} parent=1 // pred_check
      _
    $region59: #{tpu_custom_call.1} parent=1 // pred_check_branch
      %795 = sbr.rel (0) target = $region61
    $region60: #{tpu_custom_call.1} parent=1 // pred_region
      %s797 = ssub.s32 128, 128
      %798 = vsyncadd [#allocation4], %s797
      %s800 = sshll.u32 [#allocation11], 4
      %s801 = int_to_ptr.vmem [resolvable:$true] %s800
      %803 = dma.vmem_to_hbm [thread:$0]  %s801, 128, %s9, [#allocation4]
    $region61: #{tpu_custom_call.1} parent=1 // pred_fallthru
      _
    // Predicated region
    $region62: #{tpu_custom_call.1} parent=1 // pred_check
      _
    $region63: #{tpu_custom_call.1} parent=1 // pred_check_branch
      %805 = sbr.rel (0) target = $region65
    $region64: #{tpu_custom_call.1} parent=1 // pred_region
      %806 = dma.done [#allocation4], 128
    $region65: #{tpu_custom_call.1} parent=1 // pred_fallthru
      _
    %807 = vsyncpa [#allocation3], 1
    %808 = vsyncpa [#allocation6], 1
    %809 = vsyncpa [#allocation9], 1
    %810 = vsyncpa [#allocation4], 1

</llo_original>
